<compile_context>
chip_gen: v7x
topology: tpu7x:2x2x1
jax: 0.10.0
libtpu: 0.0.40
codegen_flags: <defaults>
</compile_context>

<pallas_src>
import functools

import jax
import jax.numpy as jnp
from jax.experimental import pallas as pl
from jax.experimental.pallas import tpu as pltpu


def _broadcast_latents_kernel(latents_ref, o_ref):
    # latents_ref: (row_tile, D)  tile of the latent table in VMEM
    # o_ref:       (row_tile, D)  output tile for the current batch element
    #                             (leading batch dim is squeezed away)
    o_ref[...] = latents_ref[...]


@functools.partial(jax.jit, static_argnames=("batch_size", "row_tile"))
def perceiver_embeddings(latents, *, batch_size, row_tile=None):
    """latents: (num_latents, d_latents) -> (batch_size, num_latents, d_latents)."""
    N, D = latents.shape

    # Default: the whole latent table as a single block.  Realistic Perceiver
    # sizes (e.g. 256 x 1280 f32 ~ 1.3 MiB) fit VMEM comfortably; only tile the
    # row dimension for very large tables (row_tile must then divide N and be a
    # multiple of 8 sublanes).
    if row_tile is None or row_tile >= N or N % row_tile != 0:
        row_tile = N
    num_row_tiles = N // row_tile

    # Rows outer, batch inner: the input block index (r, 0) is constant across
    # the inner batch loop, so each row tile is DMA'd from HBM only once.
    grid = (num_row_tiles, batch_size)

    out = pl.pallas_call(
        _broadcast_latents_kernel,
        out_shape=jax.ShapeDtypeStruct((batch_size, N, D), latents.dtype),
        grid_spec=pltpu.PrefetchScalarGridSpec(
            num_scalar_prefetch=0,
            grid=grid,
            in_specs=[
                pl.BlockSpec((row_tile, D), lambda r, b: (r, 0)),
            ],
            # None squeezes the batch dim: the kernel sees a (row_tile, D) ref
            # whose last dim is the full, lane-dense d_latents.
            out_specs=pl.BlockSpec((None, row_tile, D), lambda r, b: (b, r, 0)),
        ),
        compiler_params=pltpu.CompilerParams(
            dimension_semantics=("parallel", "parallel"),
            vmem_limit_bytes=48 * 1024 * 1024,  # headroom under v7x's 64 MiB
        ),
    )(latents)
    return out


if __name__ == "__main__":
    # Small shapes consistent with the module: config.num_latents, config.d_latents.
    batch_size, num_latents, d_latents = 2, 8, 32

    key = jax.random.PRNGKey(0)
    # nn.Parameter(torch.randn(num_latents, d_latents)) analogue.
    latents = jax.random.normal(key, (num_latents, d_latents), dtype=jnp.float32)

    out = perceiver_embeddings(latents, batch_size=batch_size)
    out = jax.block_until_ready(out)

    # Reference: latents.expand(batch_size, -1, -1)
    ref = jnp.broadcast_to(latents[None], (batch_size, num_latents, d_latents))
    assert out.shape == (batch_size, num_latents, d_latents)
    assert jnp.array_equal(out, ref), "mismatch vs reference"

    print("KERNEL_OK")
</pallas_src>

<mosaic_0001>
module attributes {stable_mosaic.version = 11 : i64} {
  func.func @_broadcast_latents_kernel(%arg0: i32, %arg1: i32, %arg2: memref<8x32xf32, #tpu.memory_space<vmem>>, %arg3: memref<1x8x32xf32, #tpu.memory_space<vmem>>) attributes {dimension_semantics = [#tpu.dimension_semantics<parallel>, #tpu.dimension_semantics<parallel>], iteration_bounds = array<i64: 1, 2>, scalar_prefetch = 0 : i64, scratch_operands = 0 : i64, tpu.core_type = #tpu.core_type<tc>, window_params = [{transform_indices = @transform_0, window_bounds = array<i64: 8, 32>}, {transform_indices = @transform_1, window_bounds = array<i64: 1, 8, 32>}]} {
    %c0 = arith.constant 0 : index
    %c0_0 = arith.constant 0 : index
    %0 = vector.load %arg2[%c0, %c0_0] : memref<8x32xf32, #tpu.memory_space<vmem>>, vector<8x32xf32>
    %c0_1 = arith.constant 0 : index
    %c0_2 = arith.constant 0 : index
    %c0_3 = arith.constant 0 : index
    %1 = vector.load %arg3[%c0_1, %c0_2, %c0_3] : memref<1x8x32xf32, #tpu.memory_space<vmem>>, vector<1x8x32xf32>
    %2 = vector.shape_cast %1 : vector<1x8x32xf32> to vector<8x32xf32>
    %3 = vector.shape_cast %0 : vector<8x32xf32> to vector<1x8x32xf32>
    tpu.vector_store %arg3[%c0_1, %c0_2, %c0_3], %3 {strides = array<i32>} : memref<1x8x32xf32, #tpu.memory_space<vmem>>, vector<1x8x32xf32>,
    return
  }
  func.func @transform_0(%arg0: i32, %arg1: i32) -> (i32, i32) {
    %c0_i32 = arith.constant 0 : i32
    %c0_i32_0 = arith.constant 0 : i32
    return %arg0, %c0_i32 : i32, i32
  }
  func.func @transform_1(%arg0: i32, %arg1: i32) -> (i32, i32, i32) {
    %c0_i32 = arith.constant 0 : i32
    %c0_i32_0 = arith.constant 0 : i32
    return %arg1, %arg0, %c0_i32 : i32, i32, i32
  }
}

</mosaic_0001>

<llo_original>
// kernel: perceiver_embeddings.1
$region0: #{perceiver_embeddings.1}
  #allocation0 [shape = 'u32[]', space=smem, size = 0x4, offset = 0x4, fixed_abs, tag = 'smem constant byte address 0x4 - core index']
  #allocation1 [shape = 'u32[144,128]{1,0:T(1,128)}', space=vmem, size = 0x12000, scoped, tag = 'internal scratch']
  %s0 = inlined_call_operand.hbm [shape: f32[8,32], index: 0, kind: input, shape index: {}]
  %s1 = inlined_call_operand.hbm [shape: f32[2,8,32], index: 1, kind: output, shape index: {}]
  %s2 = sld [smem:[#allocation0]]
  $region41: #{perceiver_embeddings.1} parent=0
    _
  %s4 = ssub.s32 1, %s2
  %s5 = scalar_select 0, %s4, %s2
  $region1: #{perceiver_embeddings.1} parent=0
    #allocation2 [shape = 'u8[4096]{0}', space=vmem, size = 0x1000, scoped, tag = 'input window, operand 0, single buffered']
    #allocation3 [shape = 's32[2]{0}', space=sflag, size = 0x8, scoped, tag = 'scoped memory for perceiver_embeddings.1']
    #allocation4 [shape = 's32[2]{0}', space=sflag, size = 0x8, scoped, tag = 'scoped memory for perceiver_embeddings.1']
    #allocation5 [shape = 'u8[8192]{0}', space=vmem, size = 0x2000, scoped, tag = 'output window, operand 0']
    %6 = vsyncpa [#allocation3], 0
    %7 = vsyncpa [#allocation4], 0
    %s8 = scalar_lea.sflag [#allocation4], 1
    %9 = vsyncpa %s8, 0
    loop: start=0, step=1, limit=4
    $region2: #{perceiver_embeddings.1} parent=1 // loop_pre_header
      _
    $region3: #{perceiver_embeddings.1} parent=1 // loop_header
      %s11 = sphi 0, %s15
      %p12 = scmp.ge.s32.totalorder %s11, 4
      %s18 = sphi 0, %s30
      %s19 = sphi 0, %s26
      %s20 = sphi 0, %s18
      %s21 = sphi 0, %s19
      %s22 = sphi 0, %s20
      %s23 = sphi 0, %s21
      %s33 = sphi 0, %s35
      %s36 = sphi 0, %s33
      %s37 = sphi 0, %s36
      %s53 = sphi 0, %s37
      %s61 = sphi 0, %s63
      %s64 = sphi 0, %s61
      %s65 = sphi 0, %s64
      %s81 = sphi 0, %s65
    $region4: #{perceiver_embeddings.1} parent=1 // loop_header_branch
      %14 = sbr.rel (%p12) target = $region8
    $region5: #{perceiver_embeddings.1} parent=1 // loop_body
      %s16 = ssub.s32 %s11, 1
      %s17 = ssub.s32 %s11, 2
      %s24 = sadd.s32 1, %s19
      %p25 = scmp.ge.s32.totalorder %s24, 2
      %s26 = scalar_select %p25, 0, %s24
      %s27 = sadd.s32 1, %s18
      %s28 = scalar_select %p25, %s27, %s18
      %p29 = scmp.ge.s32.totalorder %s28, 1
      %s30 = scalar_select %p29, 0, %s28
      %s31 = ssub.s32 %s18, %s30
      %p32 = scmp.eq.s32.totalorder %s31, 0
      %s34 = sadd.s32 %s33, 1
      %s35 = scalar_select %p32, %s33, %s34
      %p38 = pneg %p32
      %p39 = scmp.eq.s32.totalorder %s11, 1
      %p40 = por %p38, %p39
      %p41 = scmp.ne.s32.totalorder %s33, %s36
      %p42 = scmp.eq.s32.totalorder %s11, 0
      %p43 = por %p41, %p42
      %p44 = scmp.ne.s32.totalorder %s33, %s36
      %p45 = scmp.eq.s32.totalorder %s16, 1
      %p46 = por %p44, %p45
      %p47 = scmp.ne.s32.totalorder %s36, %s37
      %p48 = scmp.eq.s32.totalorder %s16, 0
      %p49 = por %p47, %p48
      %p50 = scmp.ne.s32.totalorder %s36, %s37
      %p51 = scmp.eq.s32.totalorder %s17, 1
      %p52 = por %p50, %p51
      %p54 = scmp.ne.s32.totalorder %s37, %s53
      %p55 = scmp.eq.s32.totalorder %s17, 0
      %p56 = por %p54, %p55
      %s57 = ssub.s32 %s19, %s26
      %s58 = ssub.s32 %s18, %s30
      %s59 = sor.u32 %s57, %s58
      %p60 = scmp.eq.s32.totalorder %s59, 0
      %s62 = sadd.s32 %s61, 1
      %s63 = scalar_select %p60, %s61, %s62
      %p66 = pneg %p60
      %p67 = scmp.eq.s32.totalorder %s11, 1
      %p68 = por %p66, %p67
      %p69 = scmp.ne.s32.totalorder %s61, %s64
      %p70 = scmp.eq.s32.totalorder %s11, 0
      %p71 = por %p69, %p70
      %p72 = scmp.ne.s32.totalorder %s61, %s64
      %p73 = scmp.eq.s32.totalorder %s16, 1
      %p74 = por %p72, %p73
      %p75 = scmp.ne.s32.totalorder %s64, %s65
      %p76 = scmp.eq.s32.totalorder %s16, 0
      %p77 = por %p75, %p76
      %p78 = scmp.ne.s32.totalorder %s64, %s65
      %p79 = scmp.eq.s32.totalorder %s17, 1
      %p80 = por %p78, %p79
      %p82 = scmp.ne.s32.totalorder %s65, %s81
      %p83 = scmp.eq.s32.totalorder %s17, 0
      %p84 = por %p82, %p83
      %p85 = scmp.le.s32.totalorder 1, %s11
      %p86 = scmp.lt.s32.totalorder %s11, 3
      %p87 = pnand %p85, %p86
      %p88 = pneg %p87
      // Predicated region
      $region9: #{perceiver_embeddings.1} parent=5 // pred_check
        _
      $region10: #{perceiver_embeddings.1} parent=5 // pred_check_branch
        %90 = sbr.rel (%p87) target = $region12
      $region11: #{perceiver_embeddings.1} parent=5 // pred_region
        %s91 = ssub.s32 %s11, 1
        // Predicated region
        $region13: #{perceiver_embeddings.1} parent=11 // pred_check
          %p92 = pneg %p49
        $region14: #{perceiver_embeddings.1} parent=11 // pred_check_branch
          %94 = sbr.rel (%p92) target = $region16
        $region15: #{perceiver_embeddings.1} parent=11 // pred_region
          %s96 = ssub.s32 128, 128
          %97 = vsyncadd [#allocation3], %s96
          %s98 = smul.addr %s20, 128
          %s99 = scalar_lea.hbm %s0, %s98
          %s101 = sshll.u32 [#allocation2], 4
          %s102 = int_to_ptr.vmem [resolvable:$true] %s101
          %104 = dma.hbm_to_vmem [thread:$0]  %s99, 128, %s102, [#allocation3]
        $region16: #{perceiver_embeddings.1} parent=11 // pred_fallthru
          _
      $region12: #{perceiver_embeddings.1} parent=5 // pred_fallthru
        _
      %p105 = scmp.lt.s32.totalorder %s11, 2
      // Predicated region
      $region17: #{perceiver_embeddings.1} parent=5 // pred_check
        %p106 = pneg %p105
      $region18: #{perceiver_embeddings.1} parent=5 // pred_check_branch
        %108 = sbr.rel (%p106) target = $region20
      $region19: #{perceiver_embeddings.1} parent=5 // pred_region
        _
      $region20: #{perceiver_embeddings.1} parent=5 // pred_fallthru
        _
      %p109 = scmp.le.s32.totalorder 1, %s11
      %p110 = scmp.lt.s32.totalorder %s11, 3
      %p111 = pnand %p109, %p110
      %p112 = pneg %p111
      // Predicated region
      $region21: #{perceiver_embeddings.1} parent=5 // pred_check
        _
      $region22: #{perceiver_embeddings.1} parent=5 // pred_check_branch
        %114 = sbr.rel (%p111) target = $region24
      $region23: #{perceiver_embeddings.1} parent=5 // pred_region
        %s115 = ssub.s32 %s11, 1
        // Predicated region
        $region25: #{perceiver_embeddings.1} parent=23 // pred_check
          %p116 = pneg %p49
        $region26: #{perceiver_embeddings.1} parent=23 // pred_check_branch
          %118 = sbr.rel (%p116) target = $region28
        $region27: #{perceiver_embeddings.1} parent=23 // pred_region
          %119 = dma.done [#allocation3], 128
        $region28: #{perceiver_embeddings.1} parent=23 // pred_fallthru
          _
        %p120 = pneg %p49
        %p121 = pneg %p46
        %p122 = pneg %p77
        %p123 = pneg %p74
        %s124 = sand.u32 %s64, 1
        %s125 = scalar_lea.sflag [#allocation4], %s124
        %s126 = sand.u32 %s64, 1
        %s127 = smul.addr %s126, 8
        %s128 = scalar_lea.vmem [#allocation5], %s127
        %v129 = vld [vmem:[#allocation2] sm:$0xff]
        %vm130 = vcmask 261120
        %131 = vst.msk [vmem:[%s128] sm:$0xff] %vm130, %v129
        %s132 = sand.u32 %s64, 1
        %s133 = scalar_lea.sflag [#allocation4], %s132
        %s134 = sand.u32 %s64, 1
        %s135 = smul.addr %s134, 8
        %s136 = scalar_lea.vmem [#allocation5], %s135
        // Predicated region
        $region29: #{perceiver_embeddings.1} parent=23 // pred_check
          %p137 = pneg %p74
        $region30: #{perceiver_embeddings.1} parent=23 // pred_check_branch
          %139 = sbr.rel (%p137) target = $region32
        $region31: #{perceiver_embeddings.1} parent=23 // pred_region
          %s141 = ssub.s32 128, 128
          %142 = vsyncadd %s133, %s141
          %s143 = sadd.s32 %s20, %s21
          %s144 = smul.addr %s143, 128
          %s145 = scalar_lea.hbm %s1, %s144
          %s147 = sshll.u32 %s136, 4
          %s148 = int_to_ptr.vmem [resolvable:$true] %s147
          %150 = dma.vmem_to_hbm [thread:$0]  %s148, 128, %s145, %s133
        $region32: #{perceiver_embeddings.1} parent=23 // pred_fallthru
          _
      $region24: #{perceiver_embeddings.1} parent=5 // pred_fallthru
        _
      %p151 = scmp.le.s32.totalorder 2, %s11
      // Predicated region
      $region33: #{perceiver_embeddings.1} parent=5 // pred_check
        %p152 = pneg %p151
      $region34: #{perceiver_embeddings.1} parent=5 // pred_check_branch
        %154 = sbr.rel (%p152) target = $region36
      $region35: #{perceiver_embeddings.1} parent=5 // pred_region
        %s155 = ssub.s32 %s11, 2
        // Predicated region
        $region37: #{perceiver_embeddings.1} parent=35 // pred_check
          %p156 = pneg %p80
        $region38: #{perceiver_embeddings.1} parent=35 // pred_check_branch
          %158 = sbr.rel (%p156) target = $region40
        $region39: #{perceiver_embeddings.1} parent=35 // pred_region
          %s159 = sand.u32 %s65, 1
          %s160 = scalar_lea.sflag [#allocation4], %s159
          %s161 = sand.u32 %s65, 1
          %s162 = smul.addr %s161, 8
          %s163 = scalar_lea.vmem [#allocation5], %s162
          %164 = dma.done %s160, 128
        $region40: #{perceiver_embeddings.1} parent=35 // pred_fallthru
          _
      $region36: #{perceiver_embeddings.1} parent=5 // pred_fallthru
        _
    $region6: #{perceiver_embeddings.1} parent=1 // loop_footer
      %s15 = sadd.s32 1, %s11
    $region7: #{perceiver_embeddings.1} parent=1 // loop_footer_branch
      %10 = sbr.rel target = $region3
    $region8: #{perceiver_embeddings.1} parent=1 // loop_exit
      _
    %165 = vsyncpa [#allocation3], 1
    %s166 = scalar_lea.sflag [#allocation3], 1
    %167 = vsyncpa %s166, 1
    %168 = vsyncpa [#allocation4], 1
    %s169 = scalar_lea.sflag [#allocation4], 1
    %170 = vsyncpa %s169, 1

</llo_original>
